<compile_context>
chip_gen: v6e
topology: v6e:2x2x1
jax: 0.10.0
libtpu: 0.0.40
codegen_flags: <defaults>
</compile_context>

<pallas_src>
import math
import numpy as np
import jax
import jax.numpy as jnp
from jax.experimental import pallas as pl
from jax.experimental.pallas import tpu as pltpu

# Module hyper-parameters (deterministic, from __init__ defaults).
GAMMA = 0.1
L = 1.0
EPS = 36.0 / 255.0
LAST_LAYER_TYPE = "classwise"


def _den():
    if LAST_LAYER_TYPE == "global":
        return math.sqrt(2.0) * L
    return 2.0 * L  # 'classwise'


def _round_up(x, m):
    return ((x + m - 1) // m) * m


def _vmem_capacity_bytes():
    """Physical VMEM per TensorCore; fall back to the smallest (v7x: 64 MiB)."""
    try:
        return int(pltpu.get_tpu_info().vmem_capacity_bytes)
    except Exception:
        return 64 << 20


def _choose_tile_b(batch, n_classes, itemsize, vmem_cap):
    """Pick the batch tile (multiple of 8) from an explicit VMEM budget."""
    if batch <= 8:
        return batch  # full-dim block (allowed: equals the array dim)
    c_pad = _round_up(n_classes, 128)
    # Per-row VMEM cost: lane-padded yp row + the padded (tb,1) int32 label vreg share.
    row_bytes = c_pad * itemsize + 512
    # ~1-4 MiB per yp buffer amortizes the ~0.35us/step overhead; never more
    # than vmem_cap/16 per buffer so v7x (64 MiB) keeps pipelining headroom.
    target = min(4 << 20, vmem_cap // 16)
    tb_budget = max(8, (target // row_bytes) // 8 * 8)
    # Guarantee >=2 grid steps whenever B allows, so v7x's 2nd TC gets work.
    tb_half = _round_up(pl.cdiv(batch, 2), 8)
    return max(8, min(tb_budget, tb_half))


def _make_kernel(batch, tile_b, inv_den, needs_mask):
    """Kernel over one (tile_b, C) batch tile; writes a per-tile partial sum
    into one aligned (8,128) output vreg (value at [0,0], zeros elsewhere)."""

    def kernel(yp_ref, yt_ref, out_ref):
        yp = yp_ref[...].astype(jnp.float32)          # (TB, C), upcast in-register
        yt = yt_ref[...]                              # (TB, 1) int32
        tb, c = yp.shape

        class_ids = jax.lax.broadcasted_iota(jnp.int32, (tb, c), 1)
        is_true = class_ids == yt                     # (TB, C) bool, no float one-hot

        # cosine_similarity(yp, one_hot(yt), dim=1): one-hot norm is exactly 1,
        # so cos = true_logit / max(||yp||, 1e-8) = true_logit * rsqrt(max(|yp|^2, 1e-16)).
        true_logit = jnp.sum(jnp.where(is_true, yp, 0.0), axis=1, keepdims=True)  # (TB,1)
        sq_norm = jnp.sum(yp * yp, axis=1, keepdims=True)
        cos = true_logit * jax.lax.rsqrt(jnp.maximum(sq_norm, 1e-16))

        # SoftVRA over the C-1 non-true classes, as a masked softmax over all C
        # columns. Including the true column (certs_true = EPS) in the max `m`
        # is safe by softmax shift-invariance; the true column is zeroed out of
        # both numerator and denominator. Do NOT "fix" this.
        certs = jnp.maximum(EPS - (true_logit - yp) * inv_den, 0.0)   # (TB, C)
        m = jnp.max(certs, axis=1, keepdims=True)                     # certs - m <= 0
        e = jnp.where(is_true, 0.0, jnp.exp(certs - m))
        s = jnp.sum(certs * e, axis=1, keepdims=True)
        z = jnp.sum(e, axis=1, keepdims=True)
        vra = s / z                                                   # one divide per row

        loss = -(1.0 - GAMMA) * cos + GAMMA * vra                     # (TB, 1)

        if needs_mask:
            # Padded rows of the ragged last tile hold garbage; any NaN/Inf they
            # produce stays within their own row and is dropped by this select.
            row_ids = (jax.lax.broadcasted_iota(jnp.int32, (tb, 1), 0)
                       + pl.program_id(0) * tile_b)
            loss = jnp.where(row_ids < batch, loss, 0.0)

        tile_sum = jnp.sum(loss)                       # cross-sublane reduce (XLU)
        r = jax.lax.broadcasted_iota(jnp.int32, (8, 128), 0)
        c2 = jax.lax.broadcasted_iota(jnp.int32, (8, 128), 1)
        out_ref[...] = jnp.where((r == 0) & (c2 == 0), tile_sum, 0.0)

    return kernel


def cosine_vra_loss(yp, yt):
    """yp: (B, C) float logits (any float dtype), yt: (B,) int labels -> scalar mean loss."""
    B, C = yp.shape
    itemsize = jnp.dtype(yp.dtype).itemsize
    vmem_cap = _vmem_capacity_bytes()

    tb = _choose_tile_b(B, C, itemsize, vmem_cap)
    num_tiles = pl.cdiv(B, tb)
    needs_mask = (B % tb) != 0
    yt2 = yt.astype(jnp.int32).reshape(B, 1)

    # VMEM actually used (double-buffered yp + padded label blocks + output vreg),
    # with generous headroom for Mosaic internal scratch.
    c_pad = _round_up(C, 128)
    est = 2 * (tb * c_pad * itemsize) + 2 * (tb * 512) + 2 * (8 * 128 * 4)
    vmem_limit = int(min(max(2 * est, 16 << 20), (3 * vmem_cap) // 4))

    cost = pl.CostEstimate(
        flops=15 * B * C,                              # realistic VPU cost (VALU-bound)
        transcendentals=B * C + B,                     # exp per element + rsqrt per row
        bytes_accessed=B * C * itemsize + B * 4 + num_tiles * 8 * 128 * 4,
    )

    partial = pl.pallas_call(
        _make_kernel(B, tb, 1.0 / _den(), needs_mask),
        out_shape=jax.ShapeDtypeStruct((num_tiles * 8, 128), jnp.float32),
        grid=(num_tiles,),
        in_specs=[
            pl.BlockSpec((tb, C), lambda i: (i, 0)),   # yp tile (double-buffered)
            pl.BlockSpec((tb, 1), lambda i: (i, 0)),   # labels tile
        ],
        out_specs=pl.BlockSpec((8, 128), lambda i: (i, 0)),  # aligned per-tile partial sum
        compiler_params=pltpu.CompilerParams(
            dimension_semantics=("parallel",),         # tiles independent -> megacore
            vmem_limit_bytes=vmem_limit,
        ),
        cost_estimate=cost,
    )(yp, yt2)

    # Each tile wrote its partial sum at [0,0] of its vreg and zeros elsewhere,
    # so a plain sum of the tiny (num_tiles*8, 128) array is the batch sum.
    # TODO(synk): rows with C so large that one padded row exceeds ~VMEM/4 are
    # not tiled over classes (full-row reductions are assumed to fit).
    return jnp.sum(partial) / B


def reference_loss(yp, yt):
    """Pure-numpy reference mirroring the PyTorch code path exactly."""
    yp = np.asarray(yp, np.float32)
    yt = np.asarray(yt)
    B, C = yp.shape
    onehot = np.eye(C, dtype=np.float32)[yt]
    true_logit = np.sum(yp * onehot, axis=1, keepdims=True)
    norm = np.sqrt(np.sum(yp * yp, axis=1))
    cos = true_logit[:, 0] / np.maximum(norm, 1e-8)
    diff = true_logit - yp
    mask = onehot.astype(bool)
    diff_red = diff[~mask].reshape(B, C - 1)
    certs = np.maximum(EPS - diff_red / _den(), 0.0)
    e = np.exp(certs - certs.max(axis=1, keepdims=True))
    p = e / e.sum(axis=1, keepdims=True)
    vra = np.sum(certs * p, axis=1)
    return float(np.mean(-(1.0 - GAMMA) * cos + GAMMA * vra))


if __name__ == "__main__":
    key = jax.random.PRNGKey(0)

    # Case 1: batch divisible by the tile (no edge masking).
    B, C = 8, 16
    k1, k2 = jax.random.split(key)
    yp = jax.random.normal(k1, (B, C), dtype=jnp.float32)
    yt = jax.random.randint(k2, (B,), 0, C, dtype=jnp.int32)
    loss = jax.block_until_ready(cosine_vra_loss(yp, yt))
    ref = reference_loss(np.asarray(yp), np.asarray(yt))
    assert np.allclose(float(loss), ref, rtol=1e-5, atol=1e-5), (float(loss), ref)

    # Case 2: ragged last tile (B=12 -> two tiles of 8, second half-empty).
    B2, C2 = 12, 16
    k3, k4 = jax.random.split(k1)
    yp2 = jax.random.normal(k3, (B2, C2), dtype=jnp.float32)
    yt2 = jax.random.randint(k4, (B2,), 0, C2, dtype=jnp.int32)
    loss2 = jax.block_until_ready(cosine_vra_loss(yp2, yt2))
    ref2 = reference_loss(np.asarray(yp2), np.asarray(yt2))
    assert np.allclose(float(loss2), ref2, rtol=1e-5, atol=1e-5), (float(loss2), ref2)

    print("KERNEL_OK")
</pallas_src>

<mosaic_0001>
module attributes {stable_mosaic.version = 11 : i64} {
  func.func @kernel(%arg0: i32, %arg1: memref<8x16xf32, #tpu.memory_space<vmem>>, %arg2: memref<8x1xi32, #tpu.memory_space<vmem>>, %arg3: memref<8x128xf32, #tpu.memory_space<vmem>>) attributes {dimension_semantics = [#tpu.dimension_semantics<parallel>], iteration_bounds = array<i64: 1>, scalar_prefetch = 0 : i64, scratch_operands = 0 : i64, tpu.core_type = #tpu.core_type<tc>, window_params = [{transform_indices = @transform_0, window_bounds = array<i64: 8, 16>}, {transform_indices = @transform_1, window_bounds = array<i64: 8, 1>}, {transform_indices = @transform_2, window_bounds = array<i64: 8, 128>}]} {
    %c0 = arith.constant 0 : index
    %c0_0 = arith.constant 0 : index
    %0 = vector.load %arg1[%c0, %c0_0] : memref<8x16xf32, #tpu.memory_space<vmem>>, vector<8x16xf32>
    %c0_1 = arith.constant 0 : index
    %c0_2 = arith.constant 0 : index
    %1 = vector.load %arg2[%c0_1, %c0_2] : memref<8x1xi32, #tpu.memory_space<vmem>>, vector<8x1xi32>
    %2 = tpu.iota {dimensions = array<i32: 1>} : vector<8x16xi32>
    %3 = vector.broadcast %1 : vector<8x1xi32> to vector<8x16xi32>
    %4 = arith.cmpi eq, %2, %3 : vector<8x16xi32>
    %cst = arith.constant 0.000000e+00 : f32
    %5 = vector.broadcast %cst : f32 to vector<8x16xf32>
    %6 = arith.select %4, %0, %5 : vector<8x16xi1>, vector<8x16xf32>
    %cst_3 = arith.constant dense<0.000000e+00> : vector<8xf32>
    %7 = vector.multi_reduction <add>, %6, %cst_3 [1] : vector<8x16xf32> to vector<8xf32>
    %8 = vector.shape_cast %7 : vector<8xf32> to vector<8x1xf32>
    %9 = arith.mulf %0, %0 : vector<8x16xf32>
    %cst_4 = arith.constant dense<0.000000e+00> : vector<8xf32>
    %10 = vector.multi_reduction <add>, %9, %cst_4 [1] : vector<8x16xf32> to vector<8xf32>
    %11 = vector.shape_cast %10 : vector<8xf32> to vector<8x1xf32>
    %cst_5 = arith.constant 1.000000e-16 : f32
    %12 = vector.broadcast %cst_5 : f32 to vector<8x1xf32>
    %13 = arith.maximumf %11, %12 : vector<8x1xf32>
    %14 = math.rsqrt %13 : vector<8x1xf32>
    %15 = arith.mulf %8, %14 : vector<8x1xf32>
    %16 = vector.broadcast %8 : vector<8x1xf32> to vector<8x16xf32>
    %17 = arith.subf %16, %0 : vector<8x16xf32>
    %cst_6 = arith.constant 5.000000e-01 : f32
    %18 = vector.broadcast %cst_6 : f32 to vector<8x16xf32>
    %19 = arith.mulf %17, %18 : vector<8x16xf32>
    %cst_7 = arith.constant 0.141176477 : f32
    %20 = vector.broadcast %cst_7 : f32 to vector<8x16xf32>
    %21 = arith.subf %20, %19 : vector<8x16xf32>
    %cst_8 = arith.constant 0.000000e+00 : f32
    %22 = vector.broadcast %cst_8 : f32 to vector<8x16xf32>
    %23 = arith.maximumf %21, %22 : vector<8x16xf32>
    %cst_9 = arith.constant dense<0xFF800000> : vector<8xf32>
    %24 = vector.multi_reduction <maximumf>, %23, %cst_9 [1] : vector<8x16xf32> to vector<8xf32>
    %25 = vector.shape_cast %24 : vector<8xf32> to vector<8x1xf32>
    %26 = vector.broadcast %25 : vector<8x1xf32> to vector<8x16xf32>
    %27 = arith.subf %23, %26 : vector<8x16xf32>
    %28 = math.exp %27 : vector<8x16xf32>
    %cst_10 = arith.constant 0.000000e+00 : f32
    %29 = vector.broadcast %cst_10 : f32 to vector<8x16xf32>
    %30 = arith.select %4, %29, %28 : vector<8x16xi1>, vector<8x16xf32>
    %31 = arith.mulf %23, %30 : vector<8x16xf32>
    %cst_11 = arith.constant dense<0.000000e+00> : vector<8xf32>
    %32 = vector.multi_reduction <add>, %31, %cst_11 [1] : vector<8x16xf32> to vector<8xf32>
    %33 = vector.shape_cast %32 : vector<8xf32> to vector<8x1xf32>
    %cst_12 = arith.constant dense<0.000000e+00> : vector<8xf32>
    %34 = vector.multi_reduction <add>, %30, %cst_12 [1] : vector<8x16xf32> to vector<8xf32>
    %35 = vector.shape_cast %34 : vector<8xf32> to vector<8x1xf32>
    %36 = arith.divf %33, %35 : vector<8x1xf32>
    %cst_13 = arith.constant -0.899999976 : f32
    %37 = vector.broadcast %cst_13 : f32 to vector<8x1xf32>
    %38 = arith.mulf %37, %15 : vector<8x1xf32>
    %cst_14 = arith.constant 1.000000e-01 : f32
    %39 = vector.broadcast %cst_14 : f32 to vector<8x1xf32>
    %40 = arith.mulf %39, %36 : vector<8x1xf32>
    %41 = arith.addf %38, %40 : vector<8x1xf32>
    %42 = vector.shape_cast %41 : vector<8x1xf32> to vector<1x8x1xf32>
    %cst_15 = arith.constant dense<0.000000e+00> : vector<1xf32>
    %43 = vector.multi_reduction <add>, %42, %cst_15 [1, 2] : vector<1x8x1xf32> to vector<1xf32>
    %44 = vector.shape_cast %43 : vector<1xf32> to vector<1x1x1xf32>
    %45 = vector.extract %44[0, 0, 0] : f32 from vector<1x1x1xf32>
    %46 = tpu.iota {dimensions = array<i32: 0>} : vector<8x128xi32>
    %47 = tpu.iota {dimensions = array<i32: 1>} : vector<8x128xi32>
    %c0_i32 = arith.constant 0 : i32
    %48 = vector.broadcast %c0_i32 : i32 to vector<8x128xi32>
    %49 = arith.cmpi eq, %46, %48 : vector<8x128xi32>
    %c0_i32_16 = arith.constant 0 : i32
    %50 = vector.broadcast %c0_i32_16 : i32 to vector<8x128xi32>
    %51 = arith.cmpi eq, %47, %50 : vector<8x128xi32>
    %52 = arith.andi %49, %51 : vector<8x128xi1>
    %cst_17 = arith.constant 0.000000e+00 : f32
    %53 = vector.broadcast %45 : f32 to vector<8x128xf32>
    %54 = vector.broadcast %cst_17 : f32 to vector<8x128xf32>
    %55 = arith.select %52, %53, %54 : vector<8x128xi1>, vector<8x128xf32>
    %c0_18 = arith.constant 0 : index
    %c0_19 = arith.constant 0 : index
    %56 = vector.load %arg3[%c0_18, %c0_19] : memref<8x128xf32, #tpu.memory_space<vmem>>, vector<8x128xf32>
    tpu.vector_store %arg3[%c0_18, %c0_19], %55 {strides = array<i32>} : memref<8x128xf32, #tpu.memory_space<vmem>>, vector<8x128xf32>,
    return
  }
  func.func @transform_0(%arg0: i32) -> (i32, i32) {
    %c0_i32 = arith.constant 0 : i32
    %c0_i32_0 = arith.constant 0 : i32
    return %arg0, %c0_i32 : i32, i32
  }
  func.func @transform_1(%arg0: i32) -> (i32, i32) {
    %c0_i32 = arith.constant 0 : i32
    %c0_i32_0 = arith.constant 0 : i32
    return %arg0, %c0_i32 : i32, i32
  }
  func.func @transform_2(%arg0: i32) -> (i32, i32) {
    %c0_i32 = arith.constant 0 : i32
    %c0_i32_0 = arith.constant 0 : i32
    return %arg0, %c0_i32 : i32, i32
  }
}

</mosaic_0001>

<llo_original>
// kernel: tpu_custom_call.1
$region0: #{tpu_custom_call.1}
  #allocation0 [shape = 'u32[]', space=smem, size = 0x4, offset = 0x4, fixed_abs, tag = 'smem constant byte address 0x4 - core index']
  #allocation1 [shape = 'u32[144,128]{1,0:T(1,128)}', space=vmem, size = 0x12000, scoped, tag = 'internal scratch']
  %s0 = inlined_call_operand.vmem [shape: f32[8,16], index: 0, kind: input, shape index: {}]
  %s1 = inlined_call_operand.vmem [shape: s32[8,1], index: 1, kind: input, shape index: {}]
  %s2 = inlined_call_operand.hbm [shape: f32[8,128], index: 2, kind: output, shape index: {}]
  %s3 = sld [smem:[#allocation0]]
  $region18: #{tpu_custom_call.1} parent=0
    _
  %s5 = ssub.s32 1, %s3
  %s6 = scalar_select 0, %s5, %s3
  $region1: #{tpu_custom_call.1} parent=0
    #allocation2 [shape = 'u8[4096]{0}', space=vmem, size = 0x1000, scoped, tag = 'output window, operand 0, single buffered']
    #allocation3 [shape = 's32[1]{0}', space=sflag, size = 0x4, scoped, tag = 'scoped memory for tpu_custom_call.1']
    %7 = vsyncpa [#allocation3], 0
    // Predicated region
    $region2: #{tpu_custom_call.1} parent=1 // pred_check
      _
    $region3: #{tpu_custom_call.1} parent=1 // pred_check_branch
      %9 = sbr.rel (0) target = $region5
    $region4: #{tpu_custom_call.1} parent=1 // pred_region
      _
    $region5: #{tpu_custom_call.1} parent=1 // pred_fallthru
      _
    // Predicated region
    $region6: #{tpu_custom_call.1} parent=1 // pred_check
      _
    $region7: #{tpu_custom_call.1} parent=1 // pred_check_branch
      %11 = sbr.rel (0) target = $region9
    $region8: #{tpu_custom_call.1} parent=1 // pred_region
      _
    $region9: #{tpu_custom_call.1} parent=1 // pred_fallthru
      _
    %v12 = vld [vmem:[%s0] sm:$0xff]
    %v13 = vld [vmem:[%s1] sm:$0xff]
    %v14 = vlaneseq
    %v15 = vand.u32 %v14, 127
    %16 = vset.pattern.permute.xlu0 0
    %17 = vperm.xlu0 %16, %v13
    %v18 = vpop.permute.xlu0 %17
    %vm19 = vcmp.eq.s32.totalorder %v15, %v18
    %v20 = vsel %vm19, %v12, 0.0
    %vm21 = vcmask 130048
    %v22 = vsel %vm21, %v20, 0.0
    %23 = vadd.xlane.f32.xlu0 %v22
    %v24 = vpop.xlane.xlu0 %23
    %v25 = vmul.f32 %v12, %v12
    %v26 = vsel %vm21, %v25, 0.0
    %27 = vadd.xlane.f32.xlu0 %v26
    %v28 = vpop.xlane.xlu0 %27
    %v29 = vmax.f32 %v28, 1e-16
    %v30 = vrsqrt.pop %v29
    %v31 = vmul.f32 %v24, %v30
    %v32 = vsub.f32 %v24, %v12
    %v33 = vmul.f32 %v32, 0.5
    %v34 = vsub.f32 0.14117648, %v33
    %v35 = vmax.f32 %v34, 0.0
    %v36 = vsel %vm21, %v35, -inf
    %37 = vmax.xlane.f32.xlu0 %v36
    %v38 = vpop.xlane.xlu0 %37
    %v39 = vsub.f32 %v35, %v38
    %v40 = vmul.f32 %v39, 1.442695
    %v41 = vpow.pop %v40
    %v42 = vsel %vm19, 0.0, %v41
    %v43 = vmul.f32 %v35, %v42
    %v44 = vsel %vm21, %v43, 0.0
    %45 = vadd.xlane.f32.xlu0 %v44
    %v46 = vpop.xlane.xlu0 %45
    %v47 = vsel %vm21, %v42, 0.0
    %48 = vadd.xlane.f32.xlu0 %v47
    %v49 = vpop.xlane.xlu0 %48
    %v50 = vrcp.pop %v49
    %v51 = vmul.f32 %v46, %v50
    %v52 = vmul.f32 %v31, -0.9
    %v53 = vmul.f32 %v51, 0.1
    %v54 = vadd.f32 %v52, %v53
    %vm55 = vcmask 7168
    %v56 = vsel %vm55, %v54, 0.0
    %57 = vadd.xlane.f32.xlu0 %v56
    %v58 = vpop.xlane.xlu0 %57
    %v59 = vrot.slane %v58, 4
    %v60 = vadd.f32 %v58, %v59
    %v61 = vrot.slane %v60, 2
    %v62 = vadd.f32 %v60, %v61
    %v63 = vrot.slane %v62, 1
    %v64 = vadd.f32 %v62, %v63
    %s65 = vtos %v64
    %v66 = vlaneseq
    %v67 = vshrl.u32 %v66, 7
    %vm68 = vcmp.eq.s32.totalorder %v67, 0
    %vm69 = vcmp.eq.s32.totalorder %v15, 0
    %vm70 = vmand %vm68, %vm69
    %v71 = vstv %s65
    %v72 = vsel %vm70, %v71, 0.0
    %73 = vst [vmem:[#allocation2] sm:$0xff] %v72
    // Predicated region
    $region10: #{tpu_custom_call.1} parent=1 // pred_check
      _
    $region11: #{tpu_custom_call.1} parent=1 // pred_check_branch
      %75 = sbr.rel (0) target = $region13
    $region12: #{tpu_custom_call.1} parent=1 // pred_region
      %s77 = ssub.s32 128, 128
      %78 = vsyncadd [#allocation3], %s77
      %s80 = sshll.u32 [#allocation2], 4
      %s81 = int_to_ptr.vmem [resolvable:$true] %s80
      %83 = dma.vmem_to_hbm [thread:$0]  %s81, 128, %s2, [#allocation3]
    $region13: #{tpu_custom_call.1} parent=1 // pred_fallthru
      _
    // Predicated region
    $region14: #{tpu_custom_call.1} parent=1 // pred_check
      _
    $region15: #{tpu_custom_call.1} parent=1 // pred_check_branch
      %85 = sbr.rel (0) target = $region17
    $region16: #{tpu_custom_call.1} parent=1 // pred_region
      %86 = dma.done [#allocation3], 128
    $region17: #{tpu_custom_call.1} parent=1 // pred_fallthru
      _
    %87 = vsyncpa [#allocation3], 1

</llo_original>
